<compile_context>
chip_gen: v7x
topology: tpu7x:2x2x1
jax: 0.10.0
libtpu: 0.0.40
codegen_flags: <defaults>
</compile_context>

<pallas_src>
from functools import partial

import jax
import jax.numpy as jnp
import numpy as np
from jax import lax
from jax.experimental import pallas as pl
from jax.experimental.pallas import tpu as pltpu

_UNROLL = 4                    # unroll factor for the serial frame recurrences
_TILE_BUDGET_BYTES = 12 << 20  # VMEM budget used to pick the frame-chunk size


def _round_up(x, m):
    return ((x + m - 1) // m) * m


def _choose_frame_tile(n_frames, batch_tile, n_pad):
    # Backward call is the widest: 3 streams (x, prefix, out), double-buffered.
    per_frame = 3 * 2 * batch_tile * n_pad * 4
    tc = max(1, min(n_frames, _TILE_BUDGET_BYTES // per_frame, 512))
    if tc >= 8:
        tc -= tc % 8
    return int(tc)


def _vmem_limit_bytes(n_streams, tc, batch_tile, n_pad):
    block_bytes = tc * batch_tile * n_pad * 4
    need = n_streams * 2 * block_bytes + batch_tile * n_pad * 4
    return int(min(56 << 20, max(32 << 20, need + need // 2)))


def _prefix_kernel(x_ref, o_ref, carry_ref):
    """Forward Hard-DTW sweep; writes prefix rows directly into the output."""
    tc, bt, n = x_ref.shape
    neg_inf = jnp.float32(-jnp.inf)
    # Loop-invariant lane mask (hoisted off the serial critical path).
    first_lane = lax.broadcasted_iota(jnp.int32, (bt, n), 1) == 0

    # Virtual all-zero row ahead of frame 0: max(0, shift(0 | -inf)) == 0,
    # so the uniform recurrence reproduces prefix[0] = x[0].
    @pl.when(pl.program_id(1) == 0)
    def _():
        carry_ref[...] = jnp.zeros_like(carry_ref)

    def step(i, row):
        shifted = jnp.where(first_lane, neg_inf, pltpu.roll(row, shift=1, axis=1))
        new_row = x_ref[i] + jnp.maximum(row, shifted)
        o_ref[i] = new_row
        return new_row

    carry_ref[...] = lax.fori_loop(0, tc, step, carry_ref[...], unroll=_UNROLL)


def _suffix_combine_kernel(x_ref, pre_ref, o_ref, carry_ref):
    """Backward Hard-DTW sweep fused with out = prefix + suffix - neg_inf_to_zero(x)."""
    tc, bt, n = x_ref.shape
    neg_inf = jnp.float32(-jnp.inf)
    last_lane = lax.broadcasted_iota(jnp.int32, (bt, n), 1) == (n - 1)

    @pl.when(pl.program_id(1) == 0)
    def _():
        carry_ref[...] = jnp.zeros_like(carry_ref)

    def step(k, row):
        i = tc - 1 - k
        xi = x_ref[i]
        shifted = jnp.where(last_lane, neg_inf,
                            pltpu.roll(row, shift=n - 1, axis=1))
        new_row = xi + jnp.maximum(row, shifted)
        o_ref[i] = pre_ref[i] + new_row - jnp.where(xi == neg_inf, 0.0, xi)
        return new_row

    carry_ref[...] = lax.fori_loop(0, tc, step, carry_ref[...], unroll=_UNROLL)


@partial(jax.jit, static_argnames=("frame_tile", "batch_tile"))
def bidirectional_hard_dtw(x, *, frame_tile=None, batch_tile=8):
    """x: (B, n_frames, n_tokens) float32 -> (B, n_frames, n_tokens) float32."""
    B, T, N = x.shape
    x = x.astype(jnp.float32)

    n_pad = _round_up(N, 128)                       # lane-dense token axis
    b_pad = _round_up(max(B, 1), batch_tile)        # full sublanes per batch tile
    tc = int(frame_tile) if frame_tile is not None else _choose_frame_tile(
        T, batch_tile, n_pad)
    t_pad = _round_up(T, tc)

    # Layout glue (outside the kernel): (B,T,N) -> (T,B,N), pad tokens/batch with
    # -inf (keeps both DP recurrences exact), trailing frames with 0 (neutral
    # carry for the backward sweep).
    x_tbn = jnp.transpose(x, (1, 0, 2))
    x_p = jnp.pad(x_tbn, ((0, 0), (0, b_pad - B), (0, n_pad - N)),
                  constant_values=float("-inf"))
    x_p = jnp.pad(x_p, ((0, t_pad - T), (0, 0), (0, 0)), constant_values=0.0)

    n_bt = b_pad // batch_tile
    n_tc = t_pad // tc
    grid = (n_bt, n_tc)                             # batch parallel, frames serial
    block = (tc, batch_tile, n_pad)
    fwd_map = lambda b, t: (t, b, 0)
    rev_map = lambda b, t: (n_tc - 1 - t, b, 0)     # stream frame-chunks in reverse

    prefix = pl.pallas_call(
        _prefix_kernel,
        out_shape=jax.ShapeDtypeStruct((t_pad, b_pad, n_pad), jnp.float32),
        grid=grid,
        in_specs=[pl.BlockSpec(block, fwd_map)],
        out_specs=pl.BlockSpec(block, fwd_map),
        scratch_shapes=[pltpu.VMEM((batch_tile, n_pad), jnp.float32)],
        compiler_params=pltpu.CompilerParams(
            dimension_semantics=("parallel", "arbitrary"),
            vmem_limit_bytes=_vmem_limit_bytes(2, tc, batch_tile, n_pad)),
    )(x_p)

    out_p = pl.pallas_call(
        _suffix_combine_kernel,
        out_shape=jax.ShapeDtypeStruct((t_pad, b_pad, n_pad), jnp.float32),
        grid=grid,
        in_specs=[pl.BlockSpec(block, rev_map), pl.BlockSpec(block, rev_map)],
        out_specs=pl.BlockSpec(block, rev_map),
        scratch_shapes=[pltpu.VMEM((batch_tile, n_pad), jnp.float32)],
        input_output_aliases={1: 0},   # write the result in place of `prefix`
        compiler_params=pltpu.CompilerParams(
            dimension_semantics=("parallel", "arbitrary"),
            vmem_limit_bytes=_vmem_limit_bytes(3, tc, batch_tile, n_pad)),
    )(x_p, prefix)

    return jnp.transpose(out_p[:T, :B, :N], (1, 0, 2))


# ---------------- pure-JAX reference (mirrors the PyTorch code) ----------------
def _hard_dtw_reference(x):
    T = x.shape[1]
    rows = [x[:, 0, :]]
    for i in range(T - 1):
        row = rows[-1]
        shifted = jnp.concatenate(
            [jnp.full_like(row[:, :1], -jnp.inf), row[:, :-1]], axis=-1)
        rows.append(x[:, i + 1, :] + jnp.maximum(row, shifted))
    return jnp.stack(rows, axis=1)


def _bidtw_reference(x):
    prefix = _hard_dtw_reference(x)
    suffix = jnp.flip(_hard_dtw_reference(jnp.flip(x, (1, 2))), (1, 2))
    return prefix + suffix - jnp.where(x == -jnp.inf, jnp.zeros_like(x), x)


if __name__ == "__main__":
    key = jax.random.PRNGKey(0)

    # Shape exercises batch padding (10->16, 2 batch tiles), frame chunking
    # (frame_tile=4 -> 3 chunks incl. padded frames) and token padding (200->256,
    # multi-lane-tile roll).
    B, T, N = 10, 10, 200
    x = jax.random.normal(key, (B, T, N), dtype=jnp.float32)
    x = x.at[:, :, N - 3:].set(float("-inf"))   # masked tokens (-inf path)
    x = x.at[0, :, 0].set(float("-inf"))

    out = jax.block_until_ready(bidirectional_hard_dtw(x, frame_tile=4))
    ref = _bidtw_reference(x)
    out_np, ref_np = np.asarray(out), np.asarray(ref)
    assert out_np.shape == (B, T, N)
    assert not np.isnan(out_np).any()
    assert np.allclose(out_np, ref_np, rtol=1e-5, atol=1e-5)

    # Second config: exact-fit shapes (no padding), default frame-tile selection.
    x2 = jax.random.normal(jax.random.PRNGKey(1), (2, 8, 128), dtype=jnp.float32)
    out2 = jax.block_until_ready(bidirectional_hard_dtw(x2))
    ref2 = _bidtw_reference(x2)
    assert np.allclose(np.asarray(out2), np.asarray(ref2), rtol=1e-5, atol=1e-5)

    print("KERNEL_OK")
</pallas_src>

<mosaic_0001>
module attributes {stable_mosaic.version = 11 : i64} {
  func.func @_prefix_kernel(%arg0: i32, %arg1: i32, %arg2: memref<4x8x256xf32, #tpu.memory_space<vmem>>, %arg3: memref<4x8x256xf32, #tpu.memory_space<vmem>>, %arg4: memref<8x256xf32, #tpu.memory_space<vmem>>) attributes {dimension_semantics = [#tpu.dimension_semantics<parallel>, #tpu.dimension_semantics<arbitrary>], iteration_bounds = array<i64: 2, 3>, scalar_prefetch = 0 : i64, scratch_operands = 1 : i64, tpu.core_type = #tpu.core_type<tc>, window_params = [{transform_indices = @transform_0, window_bounds = array<i64: 4, 8, 256>}, {transform_indices = @transform_1, window_bounds = array<i64: 4, 8, 256>}]} {
    %0 = tpu.iota {dimensions = array<i32: 1>} : vector<8x256xi32>
    %c0_i32 = arith.constant 0 : i32
    %1 = vector.broadcast %c0_i32 : i32 to vector<8x256xi32>
    %2 = arith.cmpi eq, %0, %1 : vector<8x256xi32>
    %c0_i32_0 = arith.constant 0 : i32
    %3 = arith.cmpi eq, %arg1, %c0_i32_0 : i32
    %4 = arith.extui %3 : i1 to i32
    %c0_i32_1 = arith.constant 0 : i32
    %5 = arith.cmpi ne, %4, %c0_i32_1 : i32
    scf.if %5 {
      %cst_26 = arith.constant 0.000000e+00 : f32
      %56 = vector.broadcast %cst_26 : f32 to vector<8x256xf32>
      %c0_27 = arith.constant 0 : index
      %c0_28 = arith.constant 0 : index
      %57 = vector.load %arg4[%c0_27, %c0_28] : memref<8x256xf32, #tpu.memory_space<vmem>>, vector<8x256xf32>
      tpu.vector_store %arg4[%c0_27, %c0_28], %56 {strides = array<i32>} : memref<8x256xf32, #tpu.memory_space<vmem>>, vector<8x256xf32>,
    } else {
    }
    %c0 = arith.constant 0 : index
    %c0_2 = arith.constant 0 : index
    %6 = vector.load %arg4[%c0, %c0_2] : memref<8x256xf32, #tpu.memory_space<vmem>>, vector<8x256xf32>
    %cst = arith.constant 0xFF800000 : f32
    %c0_i32_3 = arith.constant 0 : i32
    %c1_i32 = arith.constant 1 : i32
    %7 = tpu.dynamic_rotate %6 by %c1_i32 dim 1 : vector<8x256xf32>, i32 -> vector<8x256xf32>
    %8 = vector.broadcast %cst : f32 to vector<8x256xf32>
    %9 = arith.select %2, %8, %7 : vector<8x256xi1>, vector<8x256xf32>
    %10 = arith.index_cast %c0_i32_3 : i32 to index
    %c0_4 = arith.constant 0 : index
    %c0_5 = arith.constant 0 : index
    %11 = vector.load %arg2[%10, %c0_4, %c0_5] : memref<4x8x256xf32, #tpu.memory_space<vmem>>, vector<1x8x256xf32>
    %12 = vector.shape_cast %11 : vector<1x8x256xf32> to vector<8x256xf32>
    %13 = arith.maximumf %6, %9 : vector<8x256xf32>
    %14 = arith.addf %12, %13 : vector<8x256xf32>
    %15 = arith.index_cast %c0_i32_3 : i32 to index
    %c0_6 = arith.constant 0 : index
    %c0_7 = arith.constant 0 : index
    %16 = vector.load %arg3[%15, %c0_6, %c0_7] : memref<4x8x256xf32, #tpu.memory_space<vmem>>, vector<1x8x256xf32>
    %17 = vector.shape_cast %16 : vector<1x8x256xf32> to vector<8x256xf32>
    %18 = vector.shape_cast %14 : vector<8x256xf32> to vector<1x8x256xf32>
    tpu.vector_store %arg3[%15, %c0_6, %c0_7], %18 {strides = array<i32>} : memref<4x8x256xf32, #tpu.memory_space<vmem>>, vector<1x8x256xf32>,
    %c1_i32_8 = arith.constant 1 : i32
    %c1_i32_9 = arith.constant 1 : i32
    %19 = tpu.dynamic_rotate %14 by %c1_i32_9 dim 1 : vector<8x256xf32>, i32 -> vector<8x256xf32>
    %20 = vector.broadcast %cst : f32 to vector<8x256xf32>
    %21 = arith.select %2, %20, %19 : vector<8x256xi1>, vector<8x256xf32>
    %22 = arith.index_cast %c1_i32_8 : i32 to index
    %c0_10 = arith.constant 0 : index
    %c0_11 = arith.constant 0 : index
    %23 = vector.load %arg2[%22, %c0_10, %c0_11] : memref<4x8x256xf32, #tpu.memory_space<vmem>>, vector<1x8x256xf32>
    %24 = vector.shape_cast %23 : vector<1x8x256xf32> to vector<8x256xf32>
    %25 = arith.maximumf %14, %21 : vector<8x256xf32>
    %26 = arith.addf %24, %25 : vector<8x256xf32>
    %27 = arith.index_cast %c1_i32_8 : i32 to index
    %c0_12 = arith.constant 0 : index
    %c0_13 = arith.constant 0 : index
    %28 = vector.load %arg3[%27, %c0_12, %c0_13] : memref<4x8x256xf32, #tpu.memory_space<vmem>>, vector<1x8x256xf32>
    %29 = vector.shape_cast %28 : vector<1x8x256xf32> to vector<8x256xf32>
    %30 = vector.shape_cast %26 : vector<8x256xf32> to vector<1x8x256xf32>
    tpu.vector_store %arg3[%27, %c0_12, %c0_13], %30 {strides = array<i32>} : memref<4x8x256xf32, #tpu.memory_space<vmem>>, vector<1x8x256xf32>,
    %c2_i32 = arith.constant 2 : i32
    %c1_i32_14 = arith.constant 1 : i32
    %31 = tpu.dynamic_rotate %26 by %c1_i32_14 dim 1 : vector<8x256xf32>, i32 -> vector<8x256xf32>
    %32 = vector.broadcast %cst : f32 to vector<8x256xf32>
    %33 = arith.select %2, %32, %31 : vector<8x256xi1>, vector<8x256xf32>
    %34 = arith.index_cast %c2_i32 : i32 to index
    %c0_15 = arith.constant 0 : index
    %c0_16 = arith.constant 0 : index
    %35 = vector.load %arg2[%34, %c0_15, %c0_16] : memref<4x8x256xf32, #tpu.memory_space<vmem>>, vector<1x8x256xf32>
    %36 = vector.shape_cast %35 : vector<1x8x256xf32> to vector<8x256xf32>
    %37 = arith.maximumf %26, %33 : vector<8x256xf32>
    %38 = arith.addf %36, %37 : vector<8x256xf32>
    %39 = arith.index_cast %c2_i32 : i32 to index
    %c0_17 = arith.constant 0 : index
    %c0_18 = arith.constant 0 : index
    %40 = vector.load %arg3[%39, %c0_17, %c0_18] : memref<4x8x256xf32, #tpu.memory_space<vmem>>, vector<1x8x256xf32>
    %41 = vector.shape_cast %40 : vector<1x8x256xf32> to vector<8x256xf32>
    %42 = vector.shape_cast %38 : vector<8x256xf32> to vector<1x8x256xf32>
    tpu.vector_store %arg3[%39, %c0_17, %c0_18], %42 {strides = array<i32>} : memref<4x8x256xf32, #tpu.memory_space<vmem>>, vector<1x8x256xf32>,
    %c3_i32 = arith.constant 3 : i32
    %c1_i32_19 = arith.constant 1 : i32
    %43 = tpu.dynamic_rotate %38 by %c1_i32_19 dim 1 : vector<8x256xf32>, i32 -> vector<8x256xf32>
    %44 = vector.broadcast %cst : f32 to vector<8x256xf32>
    %45 = arith.select %2, %44, %43 : vector<8x256xi1>, vector<8x256xf32>
    %46 = arith.index_cast %c3_i32 : i32 to index
    %c0_20 = arith.constant 0 : index
    %c0_21 = arith.constant 0 : index
    %47 = vector.load %arg2[%46, %c0_20, %c0_21] : memref<4x8x256xf32, #tpu.memory_space<vmem>>, vector<1x8x256xf32>
    %48 = vector.shape_cast %47 : vector<1x8x256xf32> to vector<8x256xf32>
    %49 = arith.maximumf %38, %45 : vector<8x256xf32>
    %50 = arith.addf %48, %49 : vector<8x256xf32>
    %51 = arith.index_cast %c3_i32 : i32 to index
    %c0_22 = arith.constant 0 : index
    %c0_23 = arith.constant 0 : index
    %52 = vector.load %arg3[%51, %c0_22, %c0_23] : memref<4x8x256xf32, #tpu.memory_space<vmem>>, vector<1x8x256xf32>
    %53 = vector.shape_cast %52 : vector<1x8x256xf32> to vector<8x256xf32>
    %54 = vector.shape_cast %50 : vector<8x256xf32> to vector<1x8x256xf32>
    tpu.vector_store %arg3[%51, %c0_22, %c0_23], %54 {strides = array<i32>} : memref<4x8x256xf32, #tpu.memory_space<vmem>>, vector<1x8x256xf32>,
    %c4_i32 = arith.constant 4 : i32
    %c0_24 = arith.constant 0 : index
    %c0_25 = arith.constant 0 : index
    %55 = vector.load %arg4[%c0_24, %c0_25] : memref<8x256xf32, #tpu.memory_space<vmem>>, vector<8x256xf32>
    tpu.vector_store %arg4[%c0_24, %c0_25], %50 {strides = array<i32>} : memref<8x256xf32, #tpu.memory_space<vmem>>, vector<8x256xf32>,
    return
  }
  func.func @transform_0(%arg0: i32, %arg1: i32) -> (i32, i32, i32) {
    %c0_i32 = arith.constant 0 : i32
    %c0_i32_0 = arith.constant 0 : i32
    return %arg1, %arg0, %c0_i32 : i32, i32, i32
  }
  func.func @transform_1(%arg0: i32, %arg1: i32) -> (i32, i32, i32) {
    %c0_i32 = arith.constant 0 : i32
    %c0_i32_0 = arith.constant 0 : i32
    return %arg1, %arg0, %c0_i32 : i32, i32, i32
  }
}

module attributes {stable_mosaic.version = 11 : i64} {
  func.func @_suffix_combine_kernel(%arg0: i32, %arg1: i32, %arg2: memref<4x8x256xf32, #tpu.memory_space<vmem>>, %arg3: memref<4x8x256xf32, #tpu.memory_space<vmem>>, %arg4: memref<4x8x256xf32, #tpu.memory_space<vmem>>, %arg5: memref<8x256xf32, #tpu.memory_space<vmem>>) attributes {dimension_semantics = [#tpu.dimension_semantics<parallel>, #tpu.dimension_semantics<arbitrary>], iteration_bounds = array<i64: 2, 3>, scalar_prefetch = 0 : i64, scratch_operands = 1 : i64, tpu.core_type = #tpu.core_type<tc>, window_params = [{transform_indices = @transform_0, window_bounds = array<i64: 4, 8, 256>}, {transform_indices = @transform_1, window_bounds = array<i64: 4, 8, 256>}, {transform_indices = @transform_2, window_bounds = array<i64: 4, 8, 256>}]} {
    %0 = tpu.iota {dimensions = array<i32: 1>} : vector<8x256xi32>
    %c255_i32 = arith.constant 255 : i32
    %1 = vector.broadcast %c255_i32 : i32 to vector<8x256xi32>
    %2 = arith.cmpi eq, %0, %1 : vector<8x256xi32>
    %c0_i32 = arith.constant 0 : i32
    %3 = arith.cmpi eq, %arg1, %c0_i32 : i32
    %4 = arith.extui %3 : i1 to i32
    %c0_i32_0 = arith.constant 0 : i32
    %5 = arith.cmpi ne, %4, %c0_i32_0 : i32
    scf.if %5 {
      %cst_41 = arith.constant 0.000000e+00 : f32
      %96 = vector.broadcast %cst_41 : f32 to vector<8x256xf32>
      %c0_42 = arith.constant 0 : index
      %c0_43 = arith.constant 0 : index
      %97 = vector.load %arg5[%c0_42, %c0_43] : memref<8x256xf32, #tpu.memory_space<vmem>>, vector<8x256xf32>
      tpu.vector_store %arg5[%c0_42, %c0_43], %96 {strides = array<i32>} : memref<8x256xf32, #tpu.memory_space<vmem>>, vector<8x256xf32>,
    } else {
    }
    %c0 = arith.constant 0 : index
    %c0_1 = arith.constant 0 : index
    %6 = vector.load %arg5[%c0, %c0_1] : memref<8x256xf32, #tpu.memory_space<vmem>>, vector<8x256xf32>
    %cst = arith.constant 0xFF800000 : f32
    %c0_i32_2 = arith.constant 0 : i32
    %c3_i32 = arith.constant 3 : i32
    %7 = arith.subi %c3_i32, %c0_i32_2 : i32
    %8 = arith.index_cast %7 : i32 to index
    %c0_3 = arith.constant 0 : index
    %c0_4 = arith.constant 0 : index
    %9 = vector.load %arg2[%8, %c0_3, %c0_4] : memref<4x8x256xf32, #tpu.memory_space<vmem>>, vector<1x8x256xf32>
    %10 = vector.shape_cast %9 : vector<1x8x256xf32> to vector<8x256xf32>
    %c255_i32_5 = arith.constant 255 : i32
    %11 = tpu.dynamic_rotate %6 by %c255_i32_5 dim 1 : vector<8x256xf32>, i32 -> vector<8x256xf32>
    %12 = vector.broadcast %cst : f32 to vector<8x256xf32>
    %13 = arith.select %2, %12, %11 : vector<8x256xi1>, vector<8x256xf32>
    %14 = arith.maximumf %6, %13 : vector<8x256xf32>
    %15 = arith.addf %10, %14 : vector<8x256xf32>
    %16 = arith.index_cast %7 : i32 to index
    %c0_6 = arith.constant 0 : index
    %c0_7 = arith.constant 0 : index
    %17 = vector.load %arg3[%16, %c0_6, %c0_7] : memref<4x8x256xf32, #tpu.memory_space<vmem>>, vector<1x8x256xf32>
    %18 = vector.shape_cast %17 : vector<1x8x256xf32> to vector<8x256xf32>
    %19 = arith.addf %18, %15 : vector<8x256xf32>
    %20 = vector.broadcast %cst : f32 to vector<8x256xf32>
    %21 = arith.cmpf oeq, %10, %20 : vector<8x256xf32>
    %cst_8 = arith.constant 0.000000e+00 : f32
    %22 = vector.broadcast %cst_8 : f32 to vector<8x256xf32>
    %23 = arith.select %21, %22, %10 : vector<8x256xi1>, vector<8x256xf32>
    %24 = arith.subf %19, %23 : vector<8x256xf32>
    %25 = arith.index_cast %7 : i32 to index
    %c0_9 = arith.constant 0 : index
    %c0_10 = arith.constant 0 : index
    %26 = vector.load %arg4[%25, %c0_9, %c0_10] : memref<4x8x256xf32, #tpu.memory_space<vmem>>, vector<1x8x256xf32>
    %27 = vector.shape_cast %26 : vector<1x8x256xf32> to vector<8x256xf32>
    %28 = vector.shape_cast %24 : vector<8x256xf32> to vector<1x8x256xf32>
    tpu.vector_store %arg4[%25, %c0_9, %c0_10], %28 {strides = array<i32>} : memref<4x8x256xf32, #tpu.memory_space<vmem>>, vector<1x8x256xf32>,
    %c1_i32 = arith.constant 1 : i32
    %c3_i32_11 = arith.constant 3 : i32
    %29 = arith.subi %c3_i32_11, %c1_i32 : i32
    %30 = arith.index_cast %29 : i32 to index
    %c0_12 = arith.constant 0 : index
    %c0_13 = arith.constant 0 : index
    %31 = vector.load %arg2[%30, %c0_12, %c0_13] : memref<4x8x256xf32, #tpu.memory_space<vmem>>, vector<1x8x256xf32>
    %32 = vector.shape_cast %31 : vector<1x8x256xf32> to vector<8x256xf32>
    %c255_i32_14 = arith.constant 255 : i32
    %33 = tpu.dynamic_rotate %15 by %c255_i32_14 dim 1 : vector<8x256xf32>, i32 -> vector<8x256xf32>
    %34 = vector.broadcast %cst : f32 to vector<8x256xf32>
    %35 = arith.select %2, %34, %33 : vector<8x256xi1>, vector<8x256xf32>
    %36 = arith.maximumf %15, %35 : vector<8x256xf32>
    %37 = arith.addf %32, %36 : vector<8x256xf32>
    %38 = arith.index_cast %29 : i32 to index
    %c0_15 = arith.constant 0 : index
    %c0_16 = arith.constant 0 : index
    %39 = vector.load %arg3[%38, %c0_15, %c0_16] : memref<4x8x256xf32, #tpu.memory_space<vmem>>, vector<1x8x256xf32>
    %40 = vector.shape_cast %39 : vector<1x8x256xf32> to vector<8x256xf32>
    %41 = arith.addf %40, %37 : vector<8x256xf32>
    %42 = vector.broadcast %cst : f32 to vector<8x256xf32>
    %43 = arith.cmpf oeq, %32, %42 : vector<8x256xf32>
    %cst_17 = arith.constant 0.000000e+00 : f32
    %44 = vector.broadcast %cst_17 : f32 to vector<8x256xf32>
    %45 = arith.select %43, %44, %32 : vector<8x256xi1>, vector<8x256xf32>
    %46 = arith.subf %41, %45 : vector<8x256xf32>
    %47 = arith.index_cast %29 : i32 to index
    %c0_18 = arith.constant 0 : index
    %c0_19 = arith.constant 0 : index
    %48 = vector.load %arg4[%47, %c0_18, %c0_19] : memref<4x8x256xf32, #tpu.memory_space<vmem>>, vector<1x8x256xf32>
    %49 = vector.shape_cast %48 : vector<1x8x256xf32> to vector<8x256xf32>
    %50 = vector.shape_cast %46 : vector<8x256xf32> to vector<1x8x256xf32>
    tpu.vector_store %arg4[%47, %c0_18, %c0_19], %50 {strides = array<i32>} : memref<4x8x256xf32, #tpu.memory_space<vmem>>, vector<1x8x256xf32>,
    %c2_i32 = arith.constant 2 : i32
    %c3_i32_20 = arith.constant 3 : i32
    %51 = arith.subi %c3_i32_20, %c2_i32 : i32
    %52 = arith.index_cast %51 : i32 to index
    %c0_21 = arith.constant 0 : index
    %c0_22 = arith.constant 0 : index
    %53 = vector.load %arg2[%52, %c0_21, %c0_22] : memref<4x8x256xf32, #tpu.memory_space<vmem>>, vector<1x8x256xf32>
    %54 = vector.shape_cast %53 : vector<1x8x256xf32> to vector<8x256xf32>
    %c255_i32_23 = arith.constant 255 : i32
    %55 = tpu.dynamic_rotate %37 by %c255_i32_23 dim 1 : vector<8x256xf32>, i32 -> vector<8x256xf32>
    %56 = vector.broadcast %cst : f32 to vector<8x256xf32>
    %57 = arith.select %2, %56, %55 : vector<8x256xi1>, vector<8x256xf32>
    %58 = arith.maximumf %37, %57 : vector<8x256xf32>
    %59 = arith.addf %54, %58 : vector<8x256xf32>
    %60 = arith.index_cast %51 : i32 to index
    %c0_24 = arith.constant 0 : index
    %c0_25 = arith.constant 0 : index
    %61 = vector.load %arg3[%60, %c0_24, %c0_25] : memref<4x8x256xf32, #tpu.memory_space<vmem>>, vector<1x8x256xf32>
    %62 = vector.shape_cast %61 : vector<1x8x256xf32> to vector<8x256xf32>
    %63 = arith.addf %62, %59 : vector<8x256xf32>
    %64 = vector.broadcast %cst : f32 to vector<8x256xf32>
    %65 = arith.cmpf oeq, %54, %64 : vector<8x256xf32>
    %cst_26 = arith.constant 0.000000e+00 : f32
    %66 = vector.broadcast %cst_26 : f32 to vector<8x256xf32>
    %67 = arith.select %65, %66, %54 : vector<8x256xi1>, vector<8x256xf32>
    %68 = arith.subf %63, %67 : vector<8x256xf32>
    %69 = arith.index_cast %51 : i32 to index
    %c0_27 = arith.constant 0 : index
    %c0_28 = arith.constant 0 : index
    %70 = vector.load %arg4[%69, %c0_27, %c0_28] : memref<4x8x256xf32, #tpu.memory_space<vmem>>, vector<1x8x256xf32>
    %71 = vector.shape_cast %70 : vector<1x8x256xf32> to vector<8x256xf32>
    %72 = vector.shape_cast %68 : vector<8x256xf32> to vector<1x8x256xf32>
    tpu.vector_store %arg4[%69, %c0_27, %c0_28], %72 {strides = array<i32>} : memref<4x8x256xf32, #tpu.memory_space<vmem>>, vector<1x8x256xf32>,
    %c3_i32_29 = arith.constant 3 : i32
    %c3_i32_30 = arith.constant 3 : i32
    %73 = arith.subi %c3_i32_30, %c3_i32_29 : i32
    %74 = arith.index_cast %73 : i32 to index
    %c0_31 = arith.constant 0 : index
    %c0_32 = arith.constant 0 : index
    %75 = vector.load %arg2[%74, %c0_31, %c0_32] : memref<4x8x256xf32, #tpu.memory_space<vmem>>, vector<1x8x256xf32>
    %76 = vector.shape_cast %75 : vector<1x8x256xf32> to vector<8x256xf32>
    %c255_i32_33 = arith.constant 255 : i32
    %77 = tpu.dynamic_rotate %59 by %c255_i32_33 dim 1 : vector<8x256xf32>, i32 -> vector<8x256xf32>
    %78 = vector.broadcast %cst : f32 to vector<8x256xf32>
    %79 = arith.select %2, %78, %77 : vector<8x256xi1>, vector<8x256xf32>
    %80 = arith.maximumf %59, %79 : vector<8x256xf32>
    %81 = arith.addf %76, %80 : vector<8x256xf32>
    %82 = arith.index_cast %73 : i32 to index
    %c0_34 = arith.constant 0 : index
    %c0_35 = arith.constant 0 : index
    %83 = vector.load %arg3[%82, %c0_34, %c0_35] : memref<4x8x256xf32, #tpu.memory_space<vmem>>, vector<1x8x256xf32>
    %84 = vector.shape_cast %83 : vector<1x8x256xf32> to vector<8x256xf32>
    %85 = arith.addf %84, %81 : vector<8x256xf32>
    %86 = vector.broadcast %cst : f32 to vector<8x256xf32>
    %87 = arith.cmpf oeq, %76, %86 : vector<8x256xf32>
    %cst_36 = arith.constant 0.000000e+00 : f32
    %88 = vector.broadcast %cst_36 : f32 to vector<8x256xf32>
    %89 = arith.select %87, %88, %76 : vector<8x256xi1>, vector<8x256xf32>
    %90 = arith.subf %85, %89 : vector<8x256xf32>
    %91 = arith.index_cast %73 : i32 to index
    %c0_37 = arith.constant 0 : index
    %c0_38 = arith.constant 0 : index
    %92 = vector.load %arg4[%91, %c0_37, %c0_38] : memref<4x8x256xf32, #tpu.memory_space<vmem>>, vector<1x8x256xf32>
    %93 = vector.shape_cast %92 : vector<1x8x256xf32> to vector<8x256xf32>
    %94 = vector.shape_cast %90 : vector<8x256xf32> to vector<1x8x256xf32>
    tpu.vector_store %arg4[%91, %c0_37, %c0_38], %94 {strides = array<i32>} : memref<4x8x256xf32, #tpu.memory_space<vmem>>, vector<1x8x256xf32>,
    %c4_i32 = arith.constant 4 : i32
    %c0_39 = arith.constant 0 : index
    %c0_40 = arith.constant 0 : index
    %95 = vector.load %arg5[%c0_39, %c0_40] : memref<8x256xf32, #tpu.memory_space<vmem>>, vector<8x256xf32>
    tpu.vector_store %arg5[%c0_39, %c0_40], %81 {strides = array<i32>} : memref<8x256xf32, #tpu.memory_space<vmem>>, vector<8x256xf32>,
    return
  }
  func.func @transform_0(%arg0: i32, %arg1: i32) -> (i32, i32, i32) {
    %c2_i32 = arith.constant 2 : i32
    %0 = arith.subi %c2_i32, %arg1 : i32
    %c0_i32 = arith.constant 0 : i32
    %c0_i32_0 = arith.constant 0 : i32
    return %0, %arg0, %c0_i32 : i32, i32, i32
  }
  func.func @transform_1(%arg0: i32, %arg1: i32) -> (i32, i32, i32) {
    %c2_i32 = arith.constant 2 : i32
    %0 = arith.subi %c2_i32, %arg1 : i32
    %c0_i32 = arith.constant 0 : i32
    %c0_i32_0 = arith.constant 0 : i32
    return %0, %arg0, %c0_i32 : i32, i32, i32
  }
  func.func @transform_2(%arg0: i32, %arg1: i32) -> (i32, i32, i32) {
    %c2_i32 = arith.constant 2 : i32
    %0 = arith.subi %c2_i32, %arg1 : i32
    %c0_i32 = arith.constant 0 : i32
    %c0_i32_0 = arith.constant 0 : i32
    return %0, %arg0, %c0_i32 : i32, i32, i32
  }
}

</mosaic_0001>

<llo_original>
// kernel: bidirectional_hard_dtw.2
$region0: #{bidirectional_hard_dtw.2}
  #allocation0 [shape = 'u32[]', space=smem, size = 0x4, offset = 0x4, fixed_abs, tag = 'smem constant byte address 0x4 - core index']
  #allocation1 [shape = 'u32[144,128]{1,0:T(1,128)}', space=vmem, size = 0x12000, scoped, tag = 'internal scratch']
  #allocation2 [shape = 'f32[8,256]{1,0:T(8,128)}', space=vmem, size = 0x2000, scoped, tag = 'scratch operand']
  %s0 = inlined_call_operand.vmem [shape: f32[12,16,256], index: 0, kind: input, shape index: {}]
  %s1 = inlined_call_operand.vmem [shape: f32[12,16,256], index: 1, kind: output, shape index: {}]
  %s2 = sld [smem:[#allocation0]]
  $region83: #{bidirectional_hard_dtw.2} parent=0
    _
  %s4 = ssub.s32 1, %s2
  %s5 = scalar_select 0, %s4, %s2
  $region1: #{bidirectional_hard_dtw.2} parent=0
    #allocation3 [shape = 'u8[65536]{0}', space=vmem, size = 0x10000, scoped, tag = 'input window, operand 0']
    #allocation4 [shape = 'u8[65536]{0}', space=vmem, size = 0x10000, scoped, tag = 'output window, operand 0']
    loop: start=0, step=1, limit=8
    $region2: #{bidirectional_hard_dtw.2} parent=1 // loop_pre_header
      _
    $region3: #{bidirectional_hard_dtw.2} parent=1 // loop_header
      %s7 = sphi 0, %s11
      %p8 = scmp.ge.s32.totalorder %s7, 8
      %s14 = sphi 0, %s26
      %s15 = sphi 0, %s22
      %s16 = sphi 0, %s14
      %s17 = sphi 0, %s15
      %s18 = sphi 0, %s16
      %s19 = sphi 0, %s17
      %s31 = sphi 0, %s33
      %s34 = sphi 0, %s31
      %s35 = sphi 0, %s34
      %s51 = sphi 0, %s35
      %s59 = sphi 0, %s61
      %s62 = sphi 0, %s59
      %s63 = sphi 0, %s62
      %s79 = sphi 0, %s63
    $region4: #{bidirectional_hard_dtw.2} parent=1 // loop_header_branch
      %10 = sbr.rel (%p8) target = $region8
    $region5: #{bidirectional_hard_dtw.2} parent=1 // loop_body
      %s12 = ssub.s32 %s7, 1
      %s13 = ssub.s32 %s7, 2
      %s20 = sadd.s32 1, %s15
      %p21 = scmp.ge.s32.totalorder %s20, 3
      %s22 = scalar_select %p21, 0, %s20
      %s23 = sadd.s32 1, %s14
      %s24 = scalar_select %p21, %s23, %s14
      %p25 = scmp.ge.s32.totalorder %s24, 2
      %s26 = scalar_select %p25, 0, %s24
      %s27 = ssub.s32 %s15, %s22
      %s28 = ssub.s32 %s14, %s26
      %s29 = sor.u32 %s27, %s28
      %p30 = scmp.eq.s32.totalorder %s29, 0
      %s32 = sadd.s32 %s31, 1
      %s33 = scalar_select %p30, %s31, %s32
      %p36 = pneg %p30
      %p37 = scmp.eq.s32.totalorder %s7, 5
      %p38 = por %p36, %p37
      %p39 = scmp.ne.s32.totalorder %s31, %s34
      %p40 = scmp.eq.s32.totalorder %s7, 0
      %p41 = por %p39, %p40
      %p42 = scmp.ne.s32.totalorder %s31, %s34
      %p43 = scmp.eq.s32.totalorder %s12, 5
      %p44 = por %p42, %p43
      %p45 = scmp.ne.s32.totalorder %s34, %s35
      %p46 = scmp.eq.s32.totalorder %s12, 0
      %p47 = por %p45, %p46
      %p48 = scmp.ne.s32.totalorder %s34, %s35
      %p49 = scmp.eq.s32.totalorder %s13, 5
      %p50 = por %p48, %p49
      %p52 = scmp.ne.s32.totalorder %s35, %s51
      %p53 = scmp.eq.s32.totalorder %s13, 0
      %p54 = por %p52, %p53
      %s55 = ssub.s32 %s15, %s22
      %s56 = ssub.s32 %s14, %s26
      %s57 = sor.u32 %s55, %s56
      %p58 = scmp.eq.s32.totalorder %s57, 0
      %s60 = sadd.s32 %s59, 1
      %s61 = scalar_select %p58, %s59, %s60
      %p64 = pneg %p58
      %p65 = scmp.eq.s32.totalorder %s7, 5
      %p66 = por %p64, %p65
      %p67 = scmp.ne.s32.totalorder %s59, %s62
      %p68 = scmp.eq.s32.totalorder %s7, 0
      %p69 = por %p67, %p68
      %p70 = scmp.ne.s32.totalorder %s59, %s62
      %p71 = scmp.eq.s32.totalorder %s12, 5
      %p72 = por %p70, %p71
      %p73 = scmp.ne.s32.totalorder %s62, %s63
      %p74 = scmp.eq.s32.totalorder %s12, 0
      %p75 = por %p73, %p74
      %p76 = scmp.ne.s32.totalorder %s62, %s63
      %p77 = scmp.eq.s32.totalorder %s13, 5
      %p78 = por %p76, %p77
      %p80 = scmp.ne.s32.totalorder %s63, %s79
      %p81 = scmp.eq.s32.totalorder %s13, 0
      %p82 = por %p80, %p81
      %p83 = scmp.le.s32.totalorder 1, %s7
      %p84 = scmp.lt.s32.totalorder %s7, 7
      %p85 = pnand %p83, %p84
      %p86 = pneg %p85
      // Predicated region
      $region9: #{bidirectional_hard_dtw.2} parent=5 // pred_check
        _
      $region10: #{bidirectional_hard_dtw.2} parent=5 // pred_check_branch
        %88 = sbr.rel (%p85) target = $region12
      $region11: #{bidirectional_hard_dtw.2} parent=5 // pred_region
        %s89 = ssub.s32 %s7, 1
      $region12: #{bidirectional_hard_dtw.2} parent=5 // pred_fallthru
        _
      %p90 = scmp.lt.s32.totalorder %s7, 6
      // Predicated region
      $region13: #{bidirectional_hard_dtw.2} parent=5 // pred_check
        %p91 = pneg %p90
      $region14: #{bidirectional_hard_dtw.2} parent=5 // pred_check_branch
        %93 = sbr.rel (%p91) target = $region16
      $region15: #{bidirectional_hard_dtw.2} parent=5 // pred_region
        // Predicated region
        $region17: #{bidirectional_hard_dtw.2} parent=15 // pred_check
          %p94 = pneg %p41
        $region18: #{bidirectional_hard_dtw.2} parent=15 // pred_check_branch
          %96 = sbr.rel (%p94) target = $region20
        $region19: #{bidirectional_hard_dtw.2} parent=15 // pred_region
          %s97 = sand.u32 %s31, 1
          %s98 = sand.u32 %s31, 1
          %s99 = smul.addr %s98, 64
          %s100 = scalar_lea.vmem [#allocation3], %s99
          %s101 = smul.u32 4, %s15
          %s102 = smul.addr %s14, 2
          %s103 = smul.addr %s101, 4
          %s104 = sadd.s32 %s102, %s103
          %s105 = smul.addr %s104, 8
          %s106 = scalar_lea.vmem %s0, %s105
          // Predicated region
          $region21: #{bidirectional_hard_dtw.2} parent=19 // pred_check
            _
          $region22: #{bidirectional_hard_dtw.2} parent=19 // pred_check_branch
            %108 = sbr.rel (0) target = $region24
          $region23: #{bidirectional_hard_dtw.2} parent=19 // pred_region
            // Predicated region
            $region25: #{bidirectional_hard_dtw.2} parent=23 // pred_check
              _
            $region26: #{bidirectional_hard_dtw.2} parent=23 // pred_check_branch
              %110 = sbr.rel (0) target = $region28
            $region27: #{bidirectional_hard_dtw.2} parent=23 // pred_region
              loop: start=0, step=1, limit=1
              $region29: #{bidirectional_hard_dtw.2} parent=27 // loop_pre_header
                _
              $region30: #{bidirectional_hard_dtw.2} parent=27 // loop_header
                %s112 = sphi 0, %s116
                %p113 = scmp.ge.s32.totalorder %s112, 1
                %s117 = sphi %s106, %s106
                %s118 = sphi %s100, %s100
              $region31: #{bidirectional_hard_dtw.2} parent=27 // loop_header_branch
                %115 = sbr.rel (%p113) target = $region35
              $region32: #{bidirectional_hard_dtw.2} parent=27 // loop_body
                %v119 = vld [vmem:[%s117] sm:$0xff]
                %120 = vst [vmem:[%s118] sm:$0xff] %v119
                %v121 = vld [vmem:[%s117 + $0x8] sm:$0xff]
                %122 = vst [vmem:[%s118 + $0x8] sm:$0xff] %v121
                %v123 = vld [vmem:[%s117 + $0x20] sm:$0xff]
                %124 = vst [vmem:[%s118 + $0x10] sm:$0xff] %v123
                %v125 = vld [vmem:[%s117 + $0x28] sm:$0xff]
                %126 = vst [vmem:[%s118 + $0x18] sm:$0xff] %v125
                %v127 = vld [vmem:[%s117 + $0x40] sm:$0xff]
                %128 = vst [vmem:[%s118 + $0x20] sm:$0xff] %v127
                %v129 = vld [vmem:[%s117 + $0x48] sm:$0xff]
                %130 = vst [vmem:[%s118 + $0x28] sm:$0xff] %v129
                %v131 = vld [vmem:[%s117 + $0x60] sm:$0xff]
                %132 = vst [vmem:[%s118 + $0x30] sm:$0xff] %v131
                %v133 = vld [vmem:[%s117 + $0x68] sm:$0xff]
                %134 = vst [vmem:[%s118 + $0x38] sm:$0xff] %v133
              $region33: #{bidirectional_hard_dtw.2} parent=27 // loop_footer
                %s116 = sadd.s32 1, %s112
              $region34: #{bidirectional_hard_dtw.2} parent=27 // loop_footer_branch
                %111 = sbr.rel target = $region30
              $region35: #{bidirectional_hard_dtw.2} parent=27 // loop_exit
                _
            $region28: #{bidirectional_hard_dtw.2} parent=23 // pred_fallthru
              _
            // Predicated region
            $region36: #{bidirectional_hard_dtw.2} parent=23 // pred_check
              _
            $region37: #{bidirectional_hard_dtw.2} parent=23 // pred_check_branch
              %136 = sbr.rel target = $region39
            $region38: #{bidirectional_hard_dtw.2} parent=23 // pred_region
              _
            $region39: #{bidirectional_hard_dtw.2} parent=23 // pred_fallthru
              _
          $region24: #{bidirectional_hard_dtw.2} parent=19 // pred_fallthru
            _
          %137 = vnop
        $region20: #{bidirectional_hard_dtw.2} parent=15 // pred_fallthru
          _
      $region16: #{bidirectional_hard_dtw.2} parent=5 // pred_fallthru
        _
      %p138 = scmp.le.s32.totalorder 1, %s7
      %p139 = scmp.lt.s32.totalorder %s7, 7
      %p140 = pnand %p138, %p139
      %p141 = pneg %p140
      // Predicated region
      $region40: #{bidirectional_hard_dtw.2} parent=5 // pred_check
        _
      $region41: #{bidirectional_hard_dtw.2} parent=5 // pred_check_branch
        %143 = sbr.rel (%p140) target = $region43
      $region42: #{bidirectional_hard_dtw.2} parent=5 // pred_region
        %s144 = ssub.s32 %s7, 1
        %s145 = sand.u32 %s34, 1
        %s146 = sand.u32 %s34, 1
        %s147 = smul.addr %s146, 64
        %s148 = scalar_lea.vmem [#allocation3], %s147
        // Predicated region
        $region44: #{bidirectional_hard_dtw.2} parent=42 // pred_check
          %p149 = pneg %p47
        $region45: #{bidirectional_hard_dtw.2} parent=42 // pred_check_branch
          %151 = sbr.rel (%p149) target = $region47
        $region46: #{bidirectional_hard_dtw.2} parent=42 // pred_region
          _
        $region47: #{bidirectional_hard_dtw.2} parent=42 // pred_fallthru
          _
        %s152 = sand.u32 %s34, 1
        %s153 = sand.u32 %s34, 1
        %s154 = smul.addr %s153, 64
        %s155 = scalar_lea.vmem [#allocation3], %s154
        %p156 = pneg %p47
        %p157 = pneg %p44
        %p158 = pneg %p75
        %p159 = pneg %p72
        %s160 = sand.u32 %s62, 1
        %s161 = sand.u32 %s62, 1
        %s162 = smul.addr %s161, 64
        %s163 = scalar_lea.vmem [#allocation4], %s162
        %s164 = smul.u32 4, %s17
        %s165 = smul.u32 4, %s17
        %v166 = vlaneseq
        %v167 = vand.u32 %v166, 127
        %v168 = vadd.s32 %v167, 128
        %vm169 = vcmp.eq.s32.totalorder %v167, 0
        %vm170 = vcmp.eq.s32.totalorder %v168, 0
        %p171 = scmp.eq.s32.totalorder %s17, 0
        // Predicated region
        $region48: #{bidirectional_hard_dtw.2} parent=42 // pred_check
          %p172 = pneg %p171
        $region49: #{bidirectional_hard_dtw.2} parent=42 // pred_check_branch
          %174 = sbr.rel (%p172) target = $region51
        $region50: #{bidirectional_hard_dtw.2} parent=42 // pred_region
          %175 = vst [vmem:[#allocation2] sm:$0xff] 0.0
          %176 = vst [vmem:[#allocation2 + $0x8] sm:$0xff] 0.0
        $region51: #{bidirectional_hard_dtw.2} parent=42 // pred_fallthru
          _
        %v177 = vld [vmem:[#allocation2] sm:$0xff]
        %v178 = vld [vmem:[#allocation2 + $0x8] sm:$0xff]
        %179 = vrot.lane.b32.xlu0 %v177, 1
        %v180 = vpop.permute.xlu0 %179
        %181 = vrot.lane.b32.xlu0 %v178, 1
        %v182 = vpop.permute.xlu0 %181
        %vm183 = vcmp.lt.s32.totalorder %v167, 1
        %v184 = vsel %vm183, %v180, %v182
        %v185 = vsel %vm183, %v182, %v180
        %v186 = vsel %vm169, -inf, %v185
        %v187 = vsel %vm170, -inf, %v184
        %v188 = vld [vmem:[%s148] sm:$0xff]
        %v189 = vld [vmem:[%s148 + $0x8] sm:$0xff]
        %v190 = vmax.f32 %v177, %v186
        %v191 = vmax.f32 %v178, %v187
        %v192 = vadd.f32 %v188, %v190
        %v193 = vadd.f32 %v189, %v191
        %194 = vst [vmem:[%s163] sm:$0xff] %v192
        %195 = vst [vmem:[%s163 + $0x8] sm:$0xff] %v193
        %196 = vrot.lane.b32.xlu0 %v192, 1
        %v197 = vpop.permute.xlu0 %196
        %198 = vrot.lane.b32.xlu0 %v193, 1
        %v199 = vpop.permute.xlu0 %198
        %v200 = vsel %vm183, %v197, %v199
        %v201 = vsel %vm183, %v199, %v197
        %v202 = vsel %vm169, -inf, %v201
        %v203 = vsel %vm170, -inf, %v200
        %s204 = scalar_lea.vmem %s148, 16 [#allocation3]
        %v205 = vld [vmem:[%s204] sm:$0xff]
        %v206 = vld [vmem:[%s204 + $0x8] sm:$0xff]
        %v207 = vmax.f32 %v192, %v202
        %v208 = vmax.f32 %v193, %v203
        %v209 = vadd.f32 %v205, %v207
        %v210 = vadd.f32 %v206, %v208
        %s211 = scalar_lea.vmem %s163, 16 [#allocation4]
        %212 = vst [vmem:[%s211] sm:$0xff] %v209
        %213 = vst [vmem:[%s211 + $0x8] sm:$0xff] %v210
        %214 = vrot.lane.b32.xlu0 %v209, 1
        %v215 = vpop.permute.xlu0 %214
        %216 = vrot.lane.b32.xlu0 %v210, 1
        %v217 = vpop.permute.xlu0 %216
        %v218 = vsel %vm183, %v215, %v217
        %v219 = vsel %vm183, %v217, %v215
        %v220 = vsel %vm169, -inf, %v219
        %v221 = vsel %vm170, -inf, %v218
        %s222 = scalar_lea.vmem %s148, 32 [#allocation3]
        %v223 = vld [vmem:[%s222] sm:$0xff]
        %v224 = vld [vmem:[%s222 + $0x8] sm:$0xff]
        %v225 = vmax.f32 %v209, %v220
        %v226 = vmax.f32 %v210, %v221
        %v227 = vadd.f32 %v223, %v225
        %v228 = vadd.f32 %v224, %v226
        %s229 = scalar_lea.vmem %s163, 32 [#allocation4]
        %230 = vst [vmem:[%s229] sm:$0xff] %v227
        %231 = vst [vmem:[%s229 + $0x8] sm:$0xff] %v228
        %232 = vrot.lane.b32.xlu0 %v227, 1
        %v233 = vpop.permute.xlu0 %232
        %234 = vrot.lane.b32.xlu0 %v228, 1
        %v235 = vpop.permute.xlu0 %234
        %v236 = vsel %vm183, %v233, %v235
        %v237 = vsel %vm183, %v235, %v233
        %v238 = vsel %vm169, -inf, %v237
        %v239 = vsel %vm170, -inf, %v236
        %s240 = scalar_lea.vmem %s148, 48 [#allocation3]
        %v241 = vld [vmem:[%s240] sm:$0xff]
        %v242 = vld [vmem:[%s240 + $0x8] sm:$0xff]
        %v243 = vmax.f32 %v227, %v238
        %v244 = vmax.f32 %v228, %v239
        %v245 = vadd.f32 %v241, %v243
        %v246 = vadd.f32 %v242, %v244
        %s247 = scalar_lea.vmem %s163, 48 [#allocation4]
        %248 = vst [vmem:[%s247] sm:$0xff] %v245
        %249 = vst [vmem:[%s247 + $0x8] sm:$0xff] %v246
        %250 = vst [vmem:[#allocation2] sm:$0xff] %v245
        %251 = vst [vmem:[#allocation2 + $0x8] sm:$0xff] %v246
        %s252 = sand.u32 %s62, 1
        %s253 = sand.u32 %s62, 1
        %s254 = smul.addr %s253, 64
        %s255 = scalar_lea.vmem [#allocation4], %s254
        // Predicated region
        $region52: #{bidirectional_hard_dtw.2} parent=42 // pred_check
          %p256 = pneg %p72
        $region53: #{bidirectional_hard_dtw.2} parent=42 // pred_check_branch
          %258 = sbr.rel (%p256) target = $region55
        $region54: #{bidirectional_hard_dtw.2} parent=42 // pred_region
          %s259 = smul.u32 4, %s17
          %s260 = smul.addr %s16, 2
          %s261 = smul.addr %s259, 4
          %s262 = sadd.s32 %s260, %s261
          %s263 = smul.addr %s262, 8
          %s264 = scalar_lea.vmem %s1, %s263
          // Predicated region
          $region56: #{bidirectional_hard_dtw.2} parent=54 // pred_check
            _
          $region57: #{bidirectional_hard_dtw.2} parent=54 // pred_check_branch
            %266 = sbr.rel (0) target = $region59
          $region58: #{bidirectional_hard_dtw.2} parent=54 // pred_region
            // Predicated region
            $region60: #{bidirectional_hard_dtw.2} parent=58 // pred_check
              _
            $region61: #{bidirectional_hard_dtw.2} parent=58 // pred_check_branch
              %268 = sbr.rel (0) target = $region63
            $region62: #{bidirectional_hard_dtw.2} parent=58 // pred_region
              loop: start=0, step=1, limit=1
              $region64: #{bidirectional_hard_dtw.2} parent=62 // loop_pre_header
                _
              $region65: #{bidirectional_hard_dtw.2} parent=62 // loop_header
                %s270 = sphi 0, %s274
                %p271 = scmp.ge.s32.totalorder %s270, 1
                %s275 = sphi %s255, %s255
                %s276 = sphi %s264, %s264
              $region66: #{bidirectional_hard_dtw.2} parent=62 // loop_header_branch
                %273 = sbr.rel (%p271) target = $region70
              $region67: #{bidirectional_hard_dtw.2} parent=62 // loop_body
                %v277 = vld [vmem:[%s275] sm:$0xff]
                %278 = vst [vmem:[%s276] sm:$0xff] %v277
                %v279 = vld [vmem:[%s275 + $0x8] sm:$0xff]
                %280 = vst [vmem:[%s276 + $0x8] sm:$0xff] %v279
                %v281 = vld [vmem:[%s275 + $0x10] sm:$0xff]
                %282 = vst [vmem:[%s276 + $0x20] sm:$0xff] %v281
                %v283 = vld [vmem:[%s275 + $0x18] sm:$0xff]
                %284 = vst [vmem:[%s276 + $0x28] sm:$0xff] %v283
                %v285 = vld [vmem:[%s275 + $0x20] sm:$0xff]
                %286 = vst [vmem:[%s276 + $0x40] sm:$0xff] %v285
                %v287 = vld [vmem:[%s275 + $0x28] sm:$0xff]
                %288 = vst [vmem:[%s276 + $0x48] sm:$0xff] %v287
                %v289 = vld [vmem:[%s275 + $0x30] sm:$0xff]
                %290 = vst [vmem:[%s276 + $0x60] sm:$0xff] %v289
                %v291 = vld [vmem:[%s275 + $0x38] sm:$0xff]
                %292 = vst [vmem:[%s276 + $0x68] sm:$0xff] %v291
              $region68: #{bidirectional_hard_dtw.2} parent=62 // loop_footer
                %s274 = sadd.s32 1, %s270
              $region69: #{bidirectional_hard_dtw.2} parent=62 // loop_footer_branch
                %269 = sbr.rel target = $region65
              $region70: #{bidirectional_hard_dtw.2} parent=62 // loop_exit
                _
            $region63: #{bidirectional_hard_dtw.2} parent=58 // pred_fallthru
              _
            // Predicated region
            $region71: #{bidirectional_hard_dtw.2} parent=58 // pred_check
              _
            $region72: #{bidirectional_hard_dtw.2} parent=58 // pred_check_branch
              %294 = sbr.rel target = $region74
            $region73: #{bidirectional_hard_dtw.2} parent=58 // pred_region
              _
            $region74: #{bidirectional_hard_dtw.2} parent=58 // pred_fallthru
              _
          $region59: #{bidirectional_hard_dtw.2} parent=54 // pred_fallthru
            _
          %295 = vnop
        $region55: #{bidirectional_hard_dtw.2} parent=42 // pred_fallthru
          _
      $region43: #{bidirectional_hard_dtw.2} parent=5 // pred_fallthru
        _
      %p296 = scmp.le.s32.totalorder 2, %s7
      // Predicated region
      $region75: #{bidirectional_hard_dtw.2} parent=5 // pred_check
        %p297 = pneg %p296
      $region76: #{bidirectional_hard_dtw.2} parent=5 // pred_check_branch
        %299 = sbr.rel (%p297) target = $region78
      $region77: #{bidirectional_hard_dtw.2} parent=5 // pred_region
        %s300 = ssub.s32 %s7, 2
        // Predicated region
        $region79: #{bidirectional_hard_dtw.2} parent=77 // pred_check
          %p301 = pneg %p78
        $region80: #{bidirectional_hard_dtw.2} parent=77 // pred_check_branch
          %303 = sbr.rel (%p301) target = $region82
        $region81: #{bidirectional_hard_dtw.2} parent=77 // pred_region
          %s304 = sand.u32 %s63, 1
          %s305 = sand.u32 %s63, 1
          %s306 = smul.addr %s305, 64
          %s307 = scalar_lea.vmem [#allocation4], %s306
        $region82: #{bidirectional_hard_dtw.2} parent=77 // pred_fallthru
          _
      $region78: #{bidirectional_hard_dtw.2} parent=5 // pred_fallthru
        _
    $region6: #{bidirectional_hard_dtw.2} parent=1 // loop_footer
      %s11 = sadd.s32 1, %s7
    $region7: #{bidirectional_hard_dtw.2} parent=1 // loop_footer_branch
      %6 = sbr.rel target = $region3
    $region8: #{bidirectional_hard_dtw.2} parent=1 // loop_exit
      _

// kernel: bidirectional_hard_dtw.3
$region0: #{bidirectional_hard_dtw.3}
  #allocation0 [shape = 'u32[]', space=smem, size = 0x4, offset = 0x4, fixed_abs, tag = 'smem constant byte address 0x4 - core index']
  #allocation1 [shape = 'u32[144,128]{1,0:T(1,128)}', space=vmem, size = 0x12000, scoped, tag = 'internal scratch']
  #allocation2 [shape = 'f32[8,256]{1,0:T(8,128)}', space=vmem, size = 0x2000, scoped, tag = 'scratch operand']
  %s0 = inlined_call_operand.vmem [shape: f32[12,16,256], index: 0, kind: input, shape index: {}]
  %s1 = inlined_call_operand.vmem [shape: f32[12,16,256], index: 1, kind: input, shape index: {}, may-alias: {1,2}]
  %s2 = inlined_call_operand.vmem [shape: f32[12,16,256], index: 2, kind: output, shape index: {}, may-alias: {1,2}]
  %s3 = sld [smem:[#allocation0]]
  $region110: #{bidirectional_hard_dtw.3} parent=0
    _
  %s5 = ssub.s32 1, %s3
  %s6 = scalar_select 0, %s5, %s3
  $region1: #{bidirectional_hard_dtw.3} parent=0
    #allocation3 [shape = 'u8[65536]{0}', space=vmem, size = 0x10000, scoped, tag = 'input window, operand 0']
    #allocation4 [shape = 'u8[65536]{0}', space=vmem, size = 0x10000, scoped, tag = 'input window, operand 1']
    #allocation5 [shape = 'u8[65536]{0}', space=vmem, size = 0x10000, scoped, tag = 'output window, operand 0']
    loop: start=0, step=1, limit=8
    $region2: #{bidirectional_hard_dtw.3} parent=1 // loop_pre_header
      _
    $region3: #{bidirectional_hard_dtw.3} parent=1 // loop_header
      %s8 = sphi 0, %s12
      %p9 = scmp.ge.s32.totalorder %s8, 8
      %s15 = sphi 0, %s27
      %s16 = sphi 0, %s23
      %s17 = sphi 0, %s15
      %s18 = sphi 0, %s16
      %s19 = sphi 0, %s17
      %s20 = sphi 0, %s18
      %s34 = sphi 0, %s36
      %s37 = sphi 0, %s34
      %s38 = sphi 0, %s37
      %s54 = sphi 0, %s38
      %s64 = sphi 0, %s66
      %s67 = sphi 0, %s64
      %s68 = sphi 0, %s67
      %s84 = sphi 0, %s68
      %s94 = sphi 0, %s96
      %s97 = sphi 0, %s94
      %s98 = sphi 0, %s97
      %s114 = sphi 0, %s98
    $region4: #{bidirectional_hard_dtw.3} parent=1 // loop_header_branch
      %11 = sbr.rel (%p9) target = $region8
    $region5: #{bidirectional_hard_dtw.3} parent=1 // loop_body
      %s13 = ssub.s32 %s8, 1
      %s14 = ssub.s32 %s8, 2
      %s21 = sadd.s32 1, %s16
      %p22 = scmp.ge.s32.totalorder %s21, 3
      %s23 = scalar_select %p22, 0, %s21
      %s24 = sadd.s32 1, %s15
      %s25 = scalar_select %p22, %s24, %s15
      %p26 = scmp.ge.s32.totalorder %s25, 2
      %s27 = scalar_select %p26, 0, %s25
      %s28 = ssub.s32 2, %s16
      %s29 = ssub.s32 2, %s23
      %s30 = ssub.s32 %s28, %s29
      %s31 = ssub.s32 %s15, %s27
      %s32 = sor.u32 %s30, %s31
      %p33 = scmp.eq.s32.totalorder %s32, 0
      %s35 = sadd.s32 %s34, 1
      %s36 = scalar_select %p33, %s34, %s35
      %p39 = pneg %p33
      %p40 = scmp.eq.s32.totalorder %s8, 5
      %p41 = por %p39, %p40
      %p42 = scmp.ne.s32.totalorder %s34, %s37
      %p43 = scmp.eq.s32.totalorder %s8, 0
      %p44 = por %p42, %p43
      %p45 = scmp.ne.s32.totalorder %s34, %s37
      %p46 = scmp.eq.s32.totalorder %s13, 5
      %p47 = por %p45, %p46
      %p48 = scmp.ne.s32.totalorder %s37, %s38
      %p49 = scmp.eq.s32.totalorder %s13, 0
      %p50 = por %p48, %p49
      %p51 = scmp.ne.s32.totalorder %s37, %s38
      %p52 = scmp.eq.s32.totalorder %s14, 5
      %p53 = por %p51, %p52
      %p55 = scmp.ne.s32.totalorder %s38, %s54
      %p56 = scmp.eq.s32.totalorder %s14, 0
      %p57 = por %p55, %p56
      %s58 = ssub.s32 2, %s16
      %s59 = ssub.s32 2, %s23
      %s60 = ssub.s32 %s58, %s59
      %s61 = ssub.s32 %s15, %s27
      %s62 = sor.u32 %s60, %s61
      %p63 = scmp.eq.s32.totalorder %s62, 0
      %s65 = sadd.s32 %s64, 1
      %s66 = scalar_select %p63, %s64, %s65
      %p69 = pneg %p63
      %p70 = scmp.eq.s32.totalorder %s8, 5
      %p71 = por %p69, %p70
      %p72 = scmp.ne.s32.totalorder %s64, %s67
      %p73 = scmp.eq.s32.totalorder %s8, 0
      %p74 = por %p72, %p73
      %p75 = scmp.ne.s32.totalorder %s64, %s67
      %p76 = scmp.eq.s32.totalorder %s13, 5
      %p77 = por %p75, %p76
      %p78 = scmp.ne.s32.totalorder %s67, %s68
      %p79 = scmp.eq.s32.totalorder %s13, 0
      %p80 = por %p78, %p79
      %p81 = scmp.ne.s32.totalorder %s67, %s68
      %p82 = scmp.eq.s32.totalorder %s14, 5
      %p83 = por %p81, %p82
      %p85 = scmp.ne.s32.totalorder %s68, %s84
      %p86 = scmp.eq.s32.totalorder %s14, 0
      %p87 = por %p85, %p86
      %s88 = ssub.s32 2, %s16
      %s89 = ssub.s32 2, %s23
      %s90 = ssub.s32 %s88, %s89
      %s91 = ssub.s32 %s15, %s27
      %s92 = sor.u32 %s90, %s91
      %p93 = scmp.eq.s32.totalorder %s92, 0
      %s95 = sadd.s32 %s94, 1
      %s96 = scalar_select %p93, %s94, %s95
      %p99 = pneg %p93
      %p100 = scmp.eq.s32.totalorder %s8, 5
      %p101 = por %p99, %p100
      %p102 = scmp.ne.s32.totalorder %s94, %s97
      %p103 = scmp.eq.s32.totalorder %s8, 0
      %p104 = por %p102, %p103
      %p105 = scmp.ne.s32.totalorder %s94, %s97
      %p106 = scmp.eq.s32.totalorder %s13, 5
      %p107 = por %p105, %p106
      %p108 = scmp.ne.s32.totalorder %s97, %s98
      %p109 = scmp.eq.s32.totalorder %s13, 0
      %p110 = por %p108, %p109
      %p111 = scmp.ne.s32.totalorder %s97, %s98
      %p112 = scmp.eq.s32.totalorder %s14, 5
      %p113 = por %p111, %p112
      %p115 = scmp.ne.s32.totalorder %s98, %s114
      %p116 = scmp.eq.s32.totalorder %s14, 0
      %p117 = por %p115, %p116
      %p118 = scmp.le.s32.totalorder 1, %s8
      %p119 = scmp.lt.s32.totalorder %s8, 7
      %p120 = pnand %p118, %p119
      %p121 = pneg %p120
      // Predicated region
      $region9: #{bidirectional_hard_dtw.3} parent=5 // pred_check
        _
      $region10: #{bidirectional_hard_dtw.3} parent=5 // pred_check_branch
        %123 = sbr.rel (%p120) target = $region12
      $region11: #{bidirectional_hard_dtw.3} parent=5 // pred_region
        %s124 = ssub.s32 %s8, 1
      $region12: #{bidirectional_hard_dtw.3} parent=5 // pred_fallthru
        _
      %p125 = scmp.lt.s32.totalorder %s8, 6
      // Predicated region
      $region13: #{bidirectional_hard_dtw.3} parent=5 // pred_check
        %p126 = pneg %p125
      $region14: #{bidirectional_hard_dtw.3} parent=5 // pred_check_branch
        %128 = sbr.rel (%p126) target = $region16
      $region15: #{bidirectional_hard_dtw.3} parent=5 // pred_region
        // Predicated region
        $region17: #{bidirectional_hard_dtw.3} parent=15 // pred_check
          %p129 = pneg %p44
        $region18: #{bidirectional_hard_dtw.3} parent=15 // pred_check_branch
          %131 = sbr.rel (%p129) target = $region20
        $region19: #{bidirectional_hard_dtw.3} parent=15 // pred_region
          %s132 = sand.u32 %s34, 1
          %s133 = sand.u32 %s34, 1
          %s134 = smul.addr %s133, 64
          %s135 = scalar_lea.vmem [#allocation3], %s134
          %s136 = ssub.s32 2, %s16
          %s137 = smul.u32 4, %s136
          %s138 = smul.addr %s15, 2
          %s139 = smul.addr %s137, 4
          %s140 = sadd.s32 %s138, %s139
          %s141 = smul.addr %s140, 8
          %s142 = scalar_lea.vmem %s0, %s141
          // Predicated region
          $region21: #{bidirectional_hard_dtw.3} parent=19 // pred_check
            _
          $region22: #{bidirectional_hard_dtw.3} parent=19 // pred_check_branch
            %144 = sbr.rel (0) target = $region24
          $region23: #{bidirectional_hard_dtw.3} parent=19 // pred_region
            // Predicated region
            $region25: #{bidirectional_hard_dtw.3} parent=23 // pred_check
              _
            $region26: #{bidirectional_hard_dtw.3} parent=23 // pred_check_branch
              %146 = sbr.rel (0) target = $region28
            $region27: #{bidirectional_hard_dtw.3} parent=23 // pred_region
              loop: start=0, step=1, limit=1
              $region29: #{bidirectional_hard_dtw.3} parent=27 // loop_pre_header
                _
              $region30: #{bidirectional_hard_dtw.3} parent=27 // loop_header
                %s148 = sphi 0, %s152
                %p149 = scmp.ge.s32.totalorder %s148, 1
                %s153 = sphi %s142, %s142
                %s154 = sphi %s135, %s135
              $region31: #{bidirectional_hard_dtw.3} parent=27 // loop_header_branch
                %151 = sbr.rel (%p149) target = $region35
              $region32: #{bidirectional_hard_dtw.3} parent=27 // loop_body
                %v155 = vld [vmem:[%s153] sm:$0xff]
                %156 = vst [vmem:[%s154] sm:$0xff] %v155
                %v157 = vld [vmem:[%s153 + $0x8] sm:$0xff]
                %158 = vst [vmem:[%s154 + $0x8] sm:$0xff] %v157
                %v159 = vld [vmem:[%s153 + $0x20] sm:$0xff]
                %160 = vst [vmem:[%s154 + $0x10] sm:$0xff] %v159
                %v161 = vld [vmem:[%s153 + $0x28] sm:$0xff]
                %162 = vst [vmem:[%s154 + $0x18] sm:$0xff] %v161
                %v163 = vld [vmem:[%s153 + $0x40] sm:$0xff]
                %164 = vst [vmem:[%s154 + $0x20] sm:$0xff] %v163
                %v165 = vld [vmem:[%s153 + $0x48] sm:$0xff]
                %166 = vst [vmem:[%s154 + $0x28] sm:$0xff] %v165
                %v167 = vld [vmem:[%s153 + $0x60] sm:$0xff]
                %168 = vst [vmem:[%s154 + $0x30] sm:$0xff] %v167
                %v169 = vld [vmem:[%s153 + $0x68] sm:$0xff]
                %170 = vst [vmem:[%s154 + $0x38] sm:$0xff] %v169
              $region33: #{bidirectional_hard_dtw.3} parent=27 // loop_footer
                %s152 = sadd.s32 1, %s148
              $region34: #{bidirectional_hard_dtw.3} parent=27 // loop_footer_branch
                %147 = sbr.rel target = $region30
              $region35: #{bidirectional_hard_dtw.3} parent=27 // loop_exit
                _
            $region28: #{bidirectional_hard_dtw.3} parent=23 // pred_fallthru
              _
            // Predicated region
            $region36: #{bidirectional_hard_dtw.3} parent=23 // pred_check
              _
            $region37: #{bidirectional_hard_dtw.3} parent=23 // pred_check_branch
              %172 = sbr.rel target = $region39
            $region38: #{bidirectional_hard_dtw.3} parent=23 // pred_region
              _
            $region39: #{bidirectional_hard_dtw.3} parent=23 // pred_fallthru
              _
          $region24: #{bidirectional_hard_dtw.3} parent=19 // pred_fallthru
            _
          %173 = vnop
        $region20: #{bidirectional_hard_dtw.3} parent=15 // pred_fallthru
          _
        // Predicated region
        $region40: #{bidirectional_hard_dtw.3} parent=15 // pred_check
          %p174 = pneg %p74
        $region41: #{bidirectional_hard_dtw.3} parent=15 // pred_check_branch
          %176 = sbr.rel (%p174) target = $region43
        $region42: #{bidirectional_hard_dtw.3} parent=15 // pred_region
          %s177 = sand.u32 %s64, 1
          %s178 = sand.u32 %s64, 1
          %s179 = smul.addr %s178, 64
          %s180 = scalar_lea.vmem [#allocation4], %s179
          %s181 = ssub.s32 2, %s16
          %s182 = smul.u32 4, %s181
          %s183 = smul.addr %s15, 2
          %s184 = smul.addr %s182, 4
          %s185 = sadd.s32 %s183, %s184
          %s186 = smul.addr %s185, 8
          %s187 = scalar_lea.vmem %s1, %s186
          // Predicated region
          $region44: #{bidirectional_hard_dtw.3} parent=42 // pred_check
            _
          $region45: #{bidirectional_hard_dtw.3} parent=42 // pred_check_branch
            %189 = sbr.rel (0) target = $region47
          $region46: #{bidirectional_hard_dtw.3} parent=42 // pred_region
            // Predicated region
            $region48: #{bidirectional_hard_dtw.3} parent=46 // pred_check
              _
            $region49: #{bidirectional_hard_dtw.3} parent=46 // pred_check_branch
              %191 = sbr.rel (0) target = $region51
            $region50: #{bidirectional_hard_dtw.3} parent=46 // pred_region
              loop: start=0, step=1, limit=1
              $region52: #{bidirectional_hard_dtw.3} parent=50 // loop_pre_header
                _
              $region53: #{bidirectional_hard_dtw.3} parent=50 // loop_header
                %s193 = sphi 0, %s197
                %p194 = scmp.ge.s32.totalorder %s193, 1
                %s198 = sphi %s187, %s187
                %s199 = sphi %s180, %s180
              $region54: #{bidirectional_hard_dtw.3} parent=50 // loop_header_branch
                %196 = sbr.rel (%p194) target = $region58
              $region55: #{bidirectional_hard_dtw.3} parent=50 // loop_body
                %v200 = vld [vmem:[%s198] sm:$0xff]
                %201 = vst [vmem:[%s199] sm:$0xff] %v200
                %v202 = vld [vmem:[%s198 + $0x8] sm:$0xff]
                %203 = vst [vmem:[%s199 + $0x8] sm:$0xff] %v202
                %v204 = vld [vmem:[%s198 + $0x20] sm:$0xff]
                %205 = vst [vmem:[%s199 + $0x10] sm:$0xff] %v204
                %v206 = vld [vmem:[%s198 + $0x28] sm:$0xff]
                %207 = vst [vmem:[%s199 + $0x18] sm:$0xff] %v206
                %v208 = vld [vmem:[%s198 + $0x40] sm:$0xff]
                %209 = vst [vmem:[%s199 + $0x20] sm:$0xff] %v208
                %v210 = vld [vmem:[%s198 + $0x48] sm:$0xff]
                %211 = vst [vmem:[%s199 + $0x28] sm:$0xff] %v210
                %v212 = vld [vmem:[%s198 + $0x60] sm:$0xff]
                %213 = vst [vmem:[%s199 + $0x30] sm:$0xff] %v212
                %v214 = vld [vmem:[%s198 + $0x68] sm:$0xff]
                %215 = vst [vmem:[%s199 + $0x38] sm:$0xff] %v214
              $region56: #{bidirectional_hard_dtw.3} parent=50 // loop_footer
                %s197 = sadd.s32 1, %s193
              $region57: #{bidirectional_hard_dtw.3} parent=50 // loop_footer_branch
                %192 = sbr.rel target = $region53
              $region58: #{bidirectional_hard_dtw.3} parent=50 // loop_exit
                _
            $region51: #{bidirectional_hard_dtw.3} parent=46 // pred_fallthru
              _
            // Predicated region
            $region59: #{bidirectional_hard_dtw.3} parent=46 // pred_check
              _
            $region60: #{bidirectional_hard_dtw.3} parent=46 // pred_check_branch
              %217 = sbr.rel target = $region62
            $region61: #{bidirectional_hard_dtw.3} parent=46 // pred_region
              _
            $region62: #{bidirectional_hard_dtw.3} parent=46 // pred_fallthru
              _
          $region47: #{bidirectional_hard_dtw.3} parent=42 // pred_fallthru
            _
          %218 = vnop
        $region43: #{bidirectional_hard_dtw.3} parent=15 // pred_fallthru
          _
      $region16: #{bidirectional_hard_dtw.3} parent=5 // pred_fallthru
        _
      %p219 = scmp.le.s32.totalorder 1, %s8
      %p220 = scmp.lt.s32.totalorder %s8, 7
      %p221 = pnand %p219, %p220
      %p222 = pneg %p221
      // Predicated region
      $region63: #{bidirectional_hard_dtw.3} parent=5 // pred_check
        _
      $region64: #{bidirectional_hard_dtw.3} parent=5 // pred_check_branch
        %224 = sbr.rel (%p221) target = $region66
      $region65: #{bidirectional_hard_dtw.3} parent=5 // pred_region
        %s225 = ssub.s32 %s8, 1
        %s226 = sand.u32 %s37, 1
        %s227 = sand.u32 %s37, 1
        %s228 = smul.addr %s227, 64
        %s229 = scalar_lea.vmem [#allocation3], %s228
        // Predicated region
        $region67: #{bidirectional_hard_dtw.3} parent=65 // pred_check
          %p230 = pneg %p50
        $region68: #{bidirectional_hard_dtw.3} parent=65 // pred_check_branch
          %232 = sbr.rel (%p230) target = $region70
        $region69: #{bidirectional_hard_dtw.3} parent=65 // pred_region
          _
        $region70: #{bidirectional_hard_dtw.3} parent=65 // pred_fallthru
          _
        %s233 = sand.u32 %s67, 1
        %s234 = sand.u32 %s67, 1
        %s235 = smul.addr %s234, 64
        %s236 = scalar_lea.vmem [#allocation4], %s235
        // Predicated region
        $region71: #{bidirectional_hard_dtw.3} parent=65 // pred_check
          %p237 = pneg %p80
        $region72: #{bidirectional_hard_dtw.3} parent=65 // pred_check_branch
          %239 = sbr.rel (%p237) target = $region74
        $region73: #{bidirectional_hard_dtw.3} parent=65 // pred_region
          _
        $region74: #{bidirectional_hard_dtw.3} parent=65 // pred_fallthru
          _
        %s240 = sand.u32 %s37, 1
        %s241 = sand.u32 %s37, 1
        %s242 = smul.addr %s241, 64
        %s243 = scalar_lea.vmem [#allocation3], %s242
        %p244 = pneg %p50
        %p245 = pneg %p47
        %s246 = sand.u32 %s67, 1
        %s247 = sand.u32 %s67, 1
        %s248 = smul.addr %s247, 64
        %s249 = scalar_lea.vmem [#allocation4], %s248
        %p250 = pneg %p80
        %p251 = pneg %p77
        %p252 = pneg %p110
        %p253 = pneg %p107
        %s254 = sand.u32 %s97, 1
        %s255 = sand.u32 %s97, 1
        %s256 = smul.addr %s255, 64
        %s257 = scalar_lea.vmem [#allocation5], %s256
        %s258 = ssub.s32 2, %s18
        %s259 = smul.u32 4, %s258
        %s260 = ssub.s32 2, %s18
        %s261 = smul.u32 4, %s260
        %s262 = ssub.s32 2, %s18
        %s263 = smul.u32 4, %s262
        %v264 = vlaneseq
        %v265 = vand.u32 %v264, 127
        %v266 = vadd.s32 %v265, 128
        %vm267 = vcmp.eq.s32.totalorder %v265, 255
        %vm268 = vcmp.eq.s32.totalorder %v266, 255
        %p269 = scmp.eq.s32.totalorder %s18, 0
        // Predicated region
        $region75: #{bidirectional_hard_dtw.3} parent=65 // pred_check
          %p270 = pneg %p269
        $region76: #{bidirectional_hard_dtw.3} parent=65 // pred_check_branch
          %272 = sbr.rel (%p270) target = $region78
        $region77: #{bidirectional_hard_dtw.3} parent=65 // pred_region
          %273 = vst [vmem:[#allocation2] sm:$0xff] 0.0
          %274 = vst [vmem:[#allocation2 + $0x8] sm:$0xff] 0.0
        $region78: #{bidirectional_hard_dtw.3} parent=65 // pred_fallthru
          _
        %v275 = vld [vmem:[#allocation2] sm:$0xff]
        %v276 = vld [vmem:[#allocation2 + $0x8] sm:$0xff]
        %s277 = scalar_lea.vmem %s229, 48 [#allocation3]
        %v278 = vld [vmem:[%s277] sm:$0xff]
        %v279 = vld [vmem:[%s277 + $0x8] sm:$0xff]
        %280 = vrot.lane.b32.xlu0 %v275, 127
        %v281 = vpop.permute.xlu0 %280
        %282 = vrot.lane.b32.xlu0 %v276, 127
        %v283 = vpop.permute.xlu0 %282
        %vm284 = vcmp.lt.s32.totalorder %v265, 127
        %v285 = vsel %vm284, %v281, %v283
        %v286 = vsel %vm284, %v283, %v281
        %v287 = vsel %vm267, -inf, %v285
        %v288 = vsel %vm268, -inf, %v286
        %v289 = vmax.f32 %v275, %v287
        %v290 = vmax.f32 %v276, %v288
        %v291 = vadd.f32 %v278, %v289
        %v292 = vadd.f32 %v279, %v290
        %s293 = scalar_lea.vmem %s236, 48 [#allocation4]
        %v294 = vld [vmem:[%s293] sm:$0xff]
        %v295 = vld [vmem:[%s293 + $0x8] sm:$0xff]
        %v296 = vadd.f32 %v294, %v291
        %v297 = vadd.f32 %v295, %v292
        %vm298 = vcmp.eq.f32.partialorder %v278, -inf
        %vm299 = vcmp.eq.f32.partialorder %v279, -inf
        %v300 = vsel %vm298, 0.0, %v278
        %v301 = vsel %vm299, 0.0, %v279
        %v302 = vsub.f32 %v296, %v300
        %v303 = vsub.f32 %v297, %v301
        %s304 = scalar_lea.vmem %s257, 48 [#allocation5]
        %305 = vst [vmem:[%s304] sm:$0xff] %v302
        %306 = vst [vmem:[%s304 + $0x8] sm:$0xff] %v303
        %s307 = scalar_lea.vmem %s229, 32 [#allocation3]
        %v308 = vld [vmem:[%s307] sm:$0xff]
        %v309 = vld [vmem:[%s307 + $0x8] sm:$0xff]
        %310 = vrot.lane.b32.xlu0 %v291, 127
        %v311 = vpop.permute.xlu0 %310
        %312 = vrot.lane.b32.xlu0 %v292, 127
        %v313 = vpop.permute.xlu0 %312
        %v314 = vsel %vm284, %v311, %v313
        %v315 = vsel %vm284, %v313, %v311
        %v316 = vsel %vm267, -inf, %v314
        %v317 = vsel %vm268, -inf, %v315
        %v318 = vmax.f32 %v291, %v316
        %v319 = vmax.f32 %v292, %v317
        %v320 = vadd.f32 %v308, %v318
        %v321 = vadd.f32 %v309, %v319
        %s322 = scalar_lea.vmem %s236, 32 [#allocation4]
        %v323 = vld [vmem:[%s322] sm:$0xff]
        %v324 = vld [vmem:[%s322 + $0x8] sm:$0xff]
        %v325 = vadd.f32 %v323, %v320
        %v326 = vadd.f32 %v324, %v321
        %vm327 = vcmp.eq.f32.partialorder %v308, -inf
        %vm328 = vcmp.eq.f32.partialorder %v309, -inf
        %v329 = vsel %vm327, 0.0, %v308
        %v330 = vsel %vm328, 0.0, %v309
        %v331 = vsub.f32 %v325, %v329
        %v332 = vsub.f32 %v326, %v330
        %s333 = scalar_lea.vmem %s257, 32 [#allocation5]
        %334 = vst [vmem:[%s333] sm:$0xff] %v331
        %335 = vst [vmem:[%s333 + $0x8] sm:$0xff] %v332
        %s336 = scalar_lea.vmem %s229, 16 [#allocation3]
        %v337 = vld [vmem:[%s336] sm:$0xff]
        %v338 = vld [vmem:[%s336 + $0x8] sm:$0xff]
        %339 = vrot.lane.b32.xlu0 %v320, 127
        %v340 = vpop.permute.xlu0 %339
        %341 = vrot.lane.b32.xlu0 %v321, 127
        %v342 = vpop.permute.xlu0 %341
        %v343 = vsel %vm284, %v340, %v342
        %v344 = vsel %vm284, %v342, %v340
        %v345 = vsel %vm267, -inf, %v343
        %v346 = vsel %vm268, -inf, %v344
        %v347 = vmax.f32 %v320, %v345
        %v348 = vmax.f32 %v321, %v346
        %v349 = vadd.f32 %v337, %v347
        %v350 = vadd.f32 %v338, %v348
        %s351 = scalar_lea.vmem %s236, 16 [#allocation4]
        %v352 = vld [vmem:[%s351] sm:$0xff]
        %v353 = vld [vmem:[%s351 + $0x8] sm:$0xff]
        %v354 = vadd.f32 %v352, %v349
        %v355 = vadd.f32 %v353, %v350
        %vm356 = vcmp.eq.f32.partialorder %v337, -inf
        %vm357 = vcmp.eq.f32.partialorder %v338, -inf
        %v358 = vsel %vm356, 0.0, %v337
        %v359 = vsel %vm357, 0.0, %v338
        %v360 = vsub.f32 %v354, %v358
        %v361 = vsub.f32 %v355, %v359
        %s362 = scalar_lea.vmem %s257, 16 [#allocation5]
        %363 = vst [vmem:[%s362] sm:$0xff] %v360
        %364 = vst [vmem:[%s362 + $0x8] sm:$0xff] %v361
        %v365 = vld [vmem:[%s229] sm:$0xff]
        %v366 = vld [vmem:[%s229 + $0x8] sm:$0xff]
        %367 = vrot.lane.b32.xlu0 %v349, 127
        %v368 = vpop.permute.xlu0 %367
        %369 = vrot.lane.b32.xlu0 %v350, 127
        %v370 = vpop.permute.xlu0 %369
        %v371 = vsel %vm284, %v368, %v370
        %v372 = vsel %vm284, %v370, %v368
        %v373 = vsel %vm267, -inf, %v371
        %v374 = vsel %vm268, -inf, %v372
        %v375 = vmax.f32 %v349, %v373
        %v376 = vmax.f32 %v350, %v374
        %v377 = vadd.f32 %v365, %v375
        %v378 = vadd.f32 %v366, %v376
        %v379 = vld [vmem:[%s236] sm:$0xff]
        %v380 = vld [vmem:[%s236 + $0x8] sm:$0xff]
        %v381 = vadd.f32 %v379, %v377
        %v382 = vadd.f32 %v380, %v378
        %vm383 = vcmp.eq.f32.partialorder %v365, -inf
        %vm384 = vcmp.eq.f32.partialorder %v366, -inf
        %v385 = vsel %vm383, 0.0, %v365
        %v386 = vsel %vm384, 0.0, %v366
        %v387 = vsub.f32 %v381, %v385
        %v388 = vsub.f32 %v382, %v386
        %389 = vst [vmem:[%s257] sm:$0xff] %v387
        %390 = vst [vmem:[%s257 + $0x8] sm:$0xff] %v388
        %391 = vst [vmem:[#allocation2] sm:$0xff] %v377
        %392 = vst [vmem:[#allocation2 + $0x8] sm:$0xff] %v378
        %s393 = sand.u32 %s97, 1
        %s394 = sand.u32 %s97, 1
        %s395 = smul.addr %s394, 64
        %s396 = scalar_lea.vmem [#allocation5], %s395
        // Predicated region
        $region79: #{bidirectional_hard_dtw.3} parent=65 // pred_check
          %p397 = pneg %p107
        $region80: #{bidirectional_hard_dtw.3} parent=65 // pred_check_branch
          %399 = sbr.rel (%p397) target = $region82
        $region81: #{bidirectional_hard_dtw.3} parent=65 // pred_region
          %s400 = ssub.s32 2, %s18
          %s401 = smul.u32 4, %s400
          %s402 = smul.addr %s17, 2
          %s403 = smul.addr %s401, 4
          %s404 = sadd.s32 %s402, %s403
          %s405 = smul.addr %s404, 8
          %s406 = scalar_lea.vmem %s2, %s405
          // Predicated region
          $region83: #{bidirectional_hard_dtw.3} parent=81 // pred_check
            _
          $region84: #{bidirectional_hard_dtw.3} parent=81 // pred_check_branch
            %408 = sbr.rel (0) target = $region86
          $region85: #{bidirectional_hard_dtw.3} parent=81 // pred_region
            // Predicated region
            $region87: #{bidirectional_hard_dtw.3} parent=85 // pred_check
              _
            $region88: #{bidirectional_hard_dtw.3} parent=85 // pred_check_branch
              %410 = sbr.rel (0) target = $region90
            $region89: #{bidirectional_hard_dtw.3} parent=85 // pred_region
              loop: start=0, step=1, limit=1
              $region91: #{bidirectional_hard_dtw.3} parent=89 // loop_pre_header
                _
              $region92: #{bidirectional_hard_dtw.3} parent=89 // loop_header
                %s412 = sphi 0, %s416
                %p413 = scmp.ge.s32.totalorder %s412, 1
                %s417 = sphi %s396, %s396
                %s418 = sphi %s406, %s406
              $region93: #{bidirectional_hard_dtw.3} parent=89 // loop_header_branch
                %415 = sbr.rel (%p413) target = $region97
              $region94: #{bidirectional_hard_dtw.3} parent=89 // loop_body
                %v419 = vld [vmem:[%s417] sm:$0xff]
                %420 = vst [vmem:[%s418] sm:$0xff] %v419
                %v421 = vld [vmem:[%s417 + $0x8] sm:$0xff]
                %422 = vst [vmem:[%s418 + $0x8] sm:$0xff] %v421
                %v423 = vld [vmem:[%s417 + $0x10] sm:$0xff]
                %424 = vst [vmem:[%s418 + $0x20] sm:$0xff] %v423
                %v425 = vld [vmem:[%s417 + $0x18] sm:$0xff]
                %426 = vst [vmem:[%s418 + $0x28] sm:$0xff] %v425
                %v427 = vld [vmem:[%s417 + $0x20] sm:$0xff]
                %428 = vst [vmem:[%s418 + $0x40] sm:$0xff] %v427
                %v429 = vld [vmem:[%s417 + $0x28] sm:$0xff]
                %430 = vst [vmem:[%s418 + $0x48] sm:$0xff] %v429
                %v431 = vld [vmem:[%s417 + $0x30] sm:$0xff]
                %432 = vst [vmem:[%s418 + $0x60] sm:$0xff] %v431
                %v433 = vld [vmem:[%s417 + $0x38] sm:$0xff]
                %434 = vst [vmem:[%s418 + $0x68] sm:$0xff] %v433
              $region95: #{bidirectional_hard_dtw.3} parent=89 // loop_footer
                %s416 = sadd.s32 1, %s412
              $region96: #{bidirectional_hard_dtw.3} parent=89 // loop_footer_branch
                %411 = sbr.rel target = $region92
              $region97: #{bidirectional_hard_dtw.3} parent=89 // loop_exit
                _
            $region90: #{bidirectional_hard_dtw.3} parent=85 // pred_fallthru
              _
            // Predicated region
            $region98: #{bidirectional_hard_dtw.3} parent=85 // pred_check
              _
            $region99: #{bidirectional_hard_dtw.3} parent=85 // pred_check_branch
              %436 = sbr.rel target = $region101
            $region100: #{bidirectional_hard_dtw.3} parent=85 // pred_region
              _
            $region101: #{bidirectional_hard_dtw.3} parent=85 // pred_fallthru
              _
          $region86: #{bidirectional_hard_dtw.3} parent=81 // pred_fallthru
            _
          %437 = vnop
        $region82: #{bidirectional_hard_dtw.3} parent=65 // pred_fallthru
          _
      $region66: #{bidirectional_hard_dtw.3} parent=5 // pred_fallthru
        _
      %p438 = scmp.le.s32.totalorder 2, %s8
      // Predicated region
      $region102: #{bidirectional_hard_dtw.3} parent=5 // pred_check
        %p439 = pneg %p438
      $region103: #{bidirectional_hard_dtw.3} parent=5 // pred_check_branch
        %441 = sbr.rel (%p439) target = $region105
      $region104: #{bidirectional_hard_dtw.3} parent=5 // pred_region
        %s442 = ssub.s32 %s8, 2
        // Predicated region
        $region106: #{bidirectional_hard_dtw.3} parent=104 // pred_check
          %p443 = pneg %p113
        $region107: #{bidirectional_hard_dtw.3} parent=104 // pred_check_branch
          %445 = sbr.rel (%p443) target = $region109
        $region108: #{bidirectional_hard_dtw.3} parent=104 // pred_region
          %s446 = sand.u32 %s98, 1
          %s447 = sand.u32 %s98, 1
          %s448 = smul.addr %s447, 64
          %s449 = scalar_lea.vmem [#allocation5], %s448
        $region109: #{bidirectional_hard_dtw.3} parent=104 // pred_fallthru
          _
      $region105: #{bidirectional_hard_dtw.3} parent=5 // pred_fallthru
        _
    $region6: #{bidirectional_hard_dtw.3} parent=1 // loop_footer
      %s12 = sadd.s32 1, %s8
    $region7: #{bidirectional_hard_dtw.3} parent=1 // loop_footer_branch
      %7 = sbr.rel target = $region3
    $region8: #{bidirectional_hard_dtw.3} parent=1 // loop_exit
      _

</llo_original>
